<compile_context>
chip_gen: v7x
topology: tpu7x:2x2x1
jax: 0.10.0
libtpu: 0.0.40
codegen_flags: <defaults>
</compile_context>

<pallas_src>
import functools

import jax
import jax.numpy as jnp
from jax.experimental import pallas as pl
from jax.experimental.pallas import tpu as pltpu

_BN_EPS = 1e-5
_LANE = 128


def _round_up(n, m):
    return ((n + m - 1) // m) * m


def _pad2(a, rows, cols):
    return jnp.pad(a, ((0, rows - a.shape[0]), (0, cols - a.shape[1])))


def _mxu_dot(a, w, use_bf16):
    # f32 accumulation always; optionally feed the MXU bf16 operands (v6e/v7x).
    if use_bf16:
        a = a.astype(jnp.bfloat16)
        w = w.astype(jnp.bfloat16)
    return jnp.dot(a, w, preferred_element_type=jnp.float32)


# ---------------------------------------------------------------------------
# Fused single-call kernel: whole (small) batch resident in VMEM.
# ---------------------------------------------------------------------------
def _fused_mlp_kernel(x_ref,
                      w1_ref, b1_ref, g1_ref, be1_ref,
                      w2_ref, b2_ref, g2_ref, be2_ref,
                      w3_ref, b3_ref, g3_ref, be3_ref,
                      w4_ref, b4_ref,
                      o_ref, *, use_bf16):
    def bn(h, g_ref, be_ref):
        # One-pass stats + folded affine => single FMA over the (B, D) slab.
        mu = jnp.mean(h, axis=0, keepdims=True)
        var = jnp.maximum(jnp.mean(h * h, axis=0, keepdims=True) - mu * mu, 0.0)
        scale = g_ref[...] * jax.lax.rsqrt(var + _BN_EPS)   # rsqrt -> EUP slot
        shift = be_ref[...] - mu * scale
        return h * scale + shift

    x = x_ref[...]
    h = bn(jnp.maximum(_mxu_dot(x, w1_ref[...], use_bf16) + b1_ref[...], 0.0),
           g1_ref, be1_ref)
    h = bn(jnp.maximum(_mxu_dot(h, w2_ref[...], use_bf16) + b2_ref[...], 0.0),
           g2_ref, be2_ref)
    h = bn(jnp.maximum(_mxu_dot(h, w3_ref[...], use_bf16) + b3_ref[...], 0.0),
           g3_ref, be3_ref)
    # Final Linear is lane-dense (binary padded to 128); real column sliced outside.
    o_ref[...] = (_mxu_dot(h, w4_ref[...], use_bf16) + b4_ref[...]).astype(o_ref.dtype)


# ---------------------------------------------------------------------------
# Batch-tiled path: per-layer kernel that applies the previous layer's folded
# BN (scale/shift), does Linear + ReLU on a batch tile, and accumulates the
# full-batch BN statistics of its own output across the grid.
# ---------------------------------------------------------------------------
def _bn_linear_relu_stats_kernel(x_ref, sc_ref, sh_ref, w_ref, b_ref, g_ref, be_ref,
                                 h_ref, osc_ref, osh_ref,
                                 ssum_ref, ssq_ref,
                                 *, n_valid_rows, tile_rows, inv_n, use_bf16):
    i = pl.program_id(0)

    @pl.when(i == 0)
    def _():
        ssum_ref[...] = jnp.zeros_like(ssum_ref)
        ssq_ref[...] = jnp.zeros_like(ssq_ref)

    # Previous layer's BatchNorm as one FMA, then Linear + ReLU for this tile.
    xb = x_ref[...] * sc_ref[...] + sh_ref[...]
    h = jnp.maximum(_mxu_dot(xb, w_ref[...], use_bf16) + b_ref[...], 0.0)
    h_ref[...] = h

    # Accumulate full-batch statistics; mask out batch-padding rows.
    row = jax.lax.broadcasted_iota(jnp.int32, (tile_rows, 1), 0) + i * tile_rows
    hm = jnp.where(row < n_valid_rows, h, 0.0)
    ssum_ref[...] += jnp.sum(hm, axis=0, keepdims=True)
    ssq_ref[...] += jnp.sum(hm * hm, axis=0, keepdims=True)

    # Last tile: fold stats + gamma/beta into scale/shift for the next layer.
    @pl.when(i == pl.num_programs(0) - 1)
    def _():
        mu = ssum_ref[...] * inv_n
        var = jnp.maximum(ssq_ref[...] * inv_n - mu * mu, 0.0)
        scale = g_ref[...] * jax.lax.rsqrt(var + _BN_EPS)
        osc_ref[...] = scale
        osh_ref[...] = be_ref[...] - mu * scale


def _bn_linear_kernel(x_ref, sc_ref, sh_ref, w_ref, b_ref, o_ref, *, use_bf16):
    xb = x_ref[...] * sc_ref[...] + sh_ref[...]
    o_ref[...] = (_mxu_dot(xb, w_ref[...], use_bf16) + b_ref[...]).astype(o_ref.dtype)


def _linear_relu_stats_call(x, scale_in, shift_in, w, b, g, be,
                            *, tile_rows, n_valid_rows, use_bf16, vmem_limit):
    bp, din = x.shape
    dout = w.shape[1]
    kern = functools.partial(
        _bn_linear_relu_stats_kernel,
        n_valid_rows=n_valid_rows, tile_rows=tile_rows,
        inv_n=1.0 / float(n_valid_rows), use_bf16=use_bf16)
    return pl.pallas_call(
        kern,
        grid=(bp // tile_rows,),
        in_specs=[
            pl.BlockSpec((tile_rows, din), lambda i: (i, 0)),   # x tile
            pl.BlockSpec((1, din), lambda i: (0, 0)),           # scale_in
            pl.BlockSpec((1, din), lambda i: (0, 0)),           # shift_in
            pl.BlockSpec((din, dout), lambda i: (0, 0)),        # W
            pl.BlockSpec((1, dout), lambda i: (0, 0)),          # bias
            pl.BlockSpec((1, dout), lambda i: (0, 0)),          # gamma
            pl.BlockSpec((1, dout), lambda i: (0, 0)),          # beta
        ],
        out_specs=[
            pl.BlockSpec((tile_rows, dout), lambda i: (i, 0)),  # h (pre-BN activations)
            pl.BlockSpec((1, dout), lambda i: (0, 0)),          # folded scale
            pl.BlockSpec((1, dout), lambda i: (0, 0)),          # folded shift
        ],
        out_shape=[
            jax.ShapeDtypeStruct((bp, dout), jnp.float32),
            jax.ShapeDtypeStruct((1, dout), jnp.float32),
            jax.ShapeDtypeStruct((1, dout), jnp.float32),
        ],
        scratch_shapes=[pltpu.VMEM((1, dout), jnp.float32),
                        pltpu.VMEM((1, dout), jnp.float32)],
        compiler_params=pltpu.CompilerParams(
            dimension_semantics=("arbitrary",),   # stats accumulate across batch tiles
            vmem_limit_bytes=vmem_limit),
    )(x, scale_in, shift_in, w, b, g, be)


def _bn_linear_call(x, scale_in, shift_in, w, b, *, tile_rows, use_bf16, vmem_limit):
    bp, din = x.shape
    dout = w.shape[1]
    return pl.pallas_call(
        functools.partial(_bn_linear_kernel, use_bf16=use_bf16),
        grid=(bp // tile_rows,),
        in_specs=[
            pl.BlockSpec((tile_rows, din), lambda i: (i, 0)),
            pl.BlockSpec((1, din), lambda i: (0, 0)),
            pl.BlockSpec((1, din), lambda i: (0, 0)),
            pl.BlockSpec((din, dout), lambda i: (0, 0)),
            pl.BlockSpec((1, dout), lambda i: (0, 0)),
        ],
        out_specs=pl.BlockSpec((tile_rows, dout), lambda i: (i, 0)),
        out_shape=jax.ShapeDtypeStruct((bp, dout), jnp.float32),
        compiler_params=pltpu.CompilerParams(
            dimension_semantics=("parallel",),    # independent batch tiles (megacore)
            vmem_limit_bytes=vmem_limit),
    )(x, scale_in, shift_in, w, b)


# ---------------------------------------------------------------------------
# Wrapper
# ---------------------------------------------------------------------------
@functools.partial(jax.jit, static_argnames=("use_bf16", "batch_tile", "force_tiled"))
def mlp_decoder_forward(x, params, use_bf16=False, batch_tile=512, force_tiled=False):
    B, in_dim = x.shape
    hidden_dim = params["w1"].shape[1]
    out_dim = params["w3"].shape[1]
    binary = params["w4"].shape[1]

    # Lane-dense padding of every feature dim (multiples of 128).
    din = _round_up(in_dim, _LANE)
    dh = _round_up(hidden_dim, _LANE)
    do = _round_up(out_dim, _LANE)
    dn = _round_up(binary, _LANE)

    f32 = jnp.float32
    xp = _pad2(x.astype(f32), B, din)
    w1 = _pad2(params["w1"].astype(f32), din, dh); b1 = _pad2(params["b1"].astype(f32), 1, dh)
    g1 = _pad2(params["g1"].astype(f32), 1, dh);   be1 = _pad2(params["be1"].astype(f32), 1, dh)
    w2 = _pad2(params["w2"].astype(f32), dh, dh);  b2 = _pad2(params["b2"].astype(f32), 1, dh)
    g2 = _pad2(params["g2"].astype(f32), 1, dh);   be2 = _pad2(params["be2"].astype(f32), 1, dh)
    w3 = _pad2(params["w3"].astype(f32), dh, do);  b3 = _pad2(params["b3"].astype(f32), 1, do)
    g3 = _pad2(params["g3"].astype(f32), 1, do);   be3 = _pad2(params["be3"].astype(f32), 1, do)
    w4 = _pad2(params["w4"].astype(f32), do, dn);  b4 = _pad2(params["b4"].astype(f32), 1, dn)

    dmax = max(din, dh, do, dn)
    weight_bytes = 4 * (din * dh + dh * dh + dh * do + do * dn)
    fused_bytes = weight_bytes + 4 * 4 * B * dmax + (2 << 20)
    # Whole-batch-resident path only when it comfortably fits v7x's 64 MiB VMEM.
    use_fused = (not force_tiled) and (fused_bytes <= (20 << 20))

    if use_fused:
        vmem = pl.BlockSpec(memory_space=pltpu.MemorySpace.VMEM)
        operands = [xp, w1, b1, g1, be1, w2, b2, g2, be2, w3, b3, g3, be3, w4, b4]
        out_p = pl.pallas_call(
            functools.partial(_fused_mlp_kernel, use_bf16=use_bf16),
            out_shape=jax.ShapeDtypeStruct((B, dn), jnp.float32),
            in_specs=[vmem] * len(operands),
            out_specs=vmem,
            compiler_params=pltpu.CompilerParams(
                vmem_limit_bytes=int(min(max(2 * fused_bytes, 16 << 20), 48 << 20))),
        )(*operands)
    else:
        tb = max(8, min(batch_tile, _round_up(B, 8)))
        tb = _round_up(tb, 8)
        bp = _round_up(B, tb)
        xt = jnp.pad(xp, ((0, bp - B), (0, 0)))

        tiled_bytes = 4 * (2 * tb * (din + dmax) + 2 * dmax * dmax + 16 * dmax)
        vlim = int(min(max(4 * tiled_bytes, 16 << 20), 48 << 20))

        ones_in = jnp.ones((1, din), f32)
        zeros_in = jnp.zeros((1, din), f32)

        h1, sc1, sh1 = _linear_relu_stats_call(
            xt, ones_in, zeros_in, w1, b1, g1, be1,
            tile_rows=tb, n_valid_rows=B, use_bf16=use_bf16, vmem_limit=vlim)
        h2, sc2, sh2 = _linear_relu_stats_call(
            h1, sc1, sh1, w2, b2, g2, be2,
            tile_rows=tb, n_valid_rows=B, use_bf16=use_bf16, vmem_limit=vlim)
        h3, sc3, sh3 = _linear_relu_stats_call(
            h2, sc2, sh2, w3, b3, g3, be3,
            tile_rows=tb, n_valid_rows=B, use_bf16=use_bf16, vmem_limit=vlim)
        out_p = _bn_linear_call(
            h3, sc3, sh3, w4, b4,
            tile_rows=tb, use_bf16=use_bf16, vmem_limit=vlim)[:B]

    return out_p[:, :binary]


# ---------------------------------------------------------------------------
# Synthetic params / reference
# ---------------------------------------------------------------------------
def init_params(key, in_dim, hidden_dim, out_dim, binary=1):
    """Linear weights stored transposed: (in_features, out_features)."""
    ks = jax.random.split(key, 16)

    def lin(kw, kb, d_in, d_out):
        bound = 1.0 / jnp.sqrt(jnp.float32(d_in))
        w = jax.random.uniform(kw, (d_in, d_out), jnp.float32, -bound, bound)
        b = jax.random.uniform(kb, (1, d_out), jnp.float32, -bound, bound)
        return w, b

    w1, b1 = lin(ks[0], ks[1], in_dim, hidden_dim)
    w2, b2 = lin(ks[2], ks[3], hidden_dim, hidden_dim)
    w3, b3 = lin(ks[4], ks[5], hidden_dim, out_dim)
    w4, b4 = lin(ks[6], ks[7], out_dim, binary)

    def bn(kg, kb, d):
        g = 1.0 + 0.1 * jax.random.normal(kg, (1, d), jnp.float32)
        be = 0.1 * jax.random.normal(kb, (1, d), jnp.float32)
        return g, be

    g1, be1 = bn(ks[8], ks[9], hidden_dim)
    g2, be2 = bn(ks[10], ks[11], hidden_dim)
    g3, be3 = bn(ks[12], ks[13], out_dim)

    return dict(w1=w1, b1=b1, g1=g1, be1=be1,
                w2=w2, b2=b2, g2=g2, be2=be2,
                w3=w3, b3=b3, g3=g3, be3=be3,
                w4=w4, b4=b4)


def _reference_forward(x, p):
    """Pure-JAX reference of the PyTorch forward (training-mode BatchNorm)."""
    def bn(h, g, be):
        mu = jnp.mean(h, axis=0, keepdims=True)
        var = jnp.mean((h - mu) ** 2, axis=0, keepdims=True)
        return (h - mu) / jnp.sqrt(var + _BN_EPS) * g + be

    h = bn(jax.nn.relu(x @ p["w1"] + p["b1"]), p["g1"], p["be1"])
    h = bn(jax.nn.relu(h @ p["w2"] + p["b2"]), p["g2"], p["be2"])
    h = bn(jax.nn.relu(h @ p["w3"] + p["b3"]), p["g3"], p["be3"])
    return h @ p["w4"] + p["b4"]


if __name__ == "__main__":
    B, in_dim, hidden_dim, out_dim, binary = 8, 32, 32, 16, 1

    key = jax.random.PRNGKey(0)
    kx, kp, kx2 = jax.random.split(key, 3)

    x = jax.random.normal(kx, (B, in_dim), jnp.float32)
    params = init_params(kp, in_dim, hidden_dim, out_dim, binary)

    # 1) Fused single-call path (small batch, everything VMEM-resident, f32).
    out = jax.block_until_ready(mlp_decoder_forward(x, params))
    ref = _reference_forward(x, params)
    assert out.shape == (B, binary), out.shape
    assert jnp.allclose(out, ref, atol=2e-4, rtol=2e-4), (
        float(jnp.max(jnp.abs(out - ref))))

    # 2) Batch-tiled path: grid over batch tiles with full-batch BN statistics
    #    accumulated across the "arbitrary" axis (also exercises row masking).
    B2 = 300
    x2 = jax.random.normal(kx2, (B2, in_dim), jnp.float32)
    out2 = jax.block_until_ready(
        mlp_decoder_forward(x2, params, batch_tile=128, force_tiled=True))
    ref2 = _reference_forward(x2, params)
    assert out2.shape == (B2, binary), out2.shape
    assert jnp.allclose(out2, ref2, atol=1e-3, rtol=1e-3), (
        float(jnp.max(jnp.abs(out2 - ref2))))

    # 3) bf16 MXU operand variant (v6e/v7x): lowering/runtime coverage only.
    out_bf16 = jax.block_until_ready(mlp_decoder_forward(x, params, use_bf16=True))
    assert out_bf16.shape == (B, binary)
    assert bool(jnp.all(jnp.isfinite(out_bf16)))

    print("KERNEL_OK")
</pallas_src>

<mosaic_0001>
module attributes {stable_mosaic.version = 11 : i64} {
  func.func @_fused_mlp_kernel(%arg0: memref<8x128xf32, #tpu.memory_space<vmem>>, %arg1: memref<128x128xf32, #tpu.memory_space<vmem>>, %arg2: memref<1x128xf32, #tpu.memory_space<vmem>>, %arg3: memref<1x128xf32, #tpu.memory_space<vmem>>, %arg4: memref<1x128xf32, #tpu.memory_space<vmem>>, %arg5: memref<128x128xf32, #tpu.memory_space<vmem>>, %arg6: memref<1x128xf32, #tpu.memory_space<vmem>>, %arg7: memref<1x128xf32, #tpu.memory_space<vmem>>, %arg8: memref<1x128xf32, #tpu.memory_space<vmem>>, %arg9: memref<128x128xf32, #tpu.memory_space<vmem>>, %arg10: memref<1x128xf32, #tpu.memory_space<vmem>>, %arg11: memref<1x128xf32, #tpu.memory_space<vmem>>, %arg12: memref<1x128xf32, #tpu.memory_space<vmem>>, %arg13: memref<128x128xf32, #tpu.memory_space<vmem>>, %arg14: memref<1x128xf32, #tpu.memory_space<vmem>>, %arg15: memref<8x128xf32, #tpu.memory_space<vmem>>) attributes {dimension_semantics = [], scalar_prefetch = 0 : i64, scratch_operands = 0 : i64, tpu.core_type = #tpu.core_type<tc>} {
    %c0 = arith.constant 0 : index
    %c0_0 = arith.constant 0 : index
    %0 = vector.load %arg0[%c0, %c0_0] : memref<8x128xf32, #tpu.memory_space<vmem>>, vector<8x128xf32>
    %c0_1 = arith.constant 0 : index
    %c0_2 = arith.constant 0 : index
    %1 = vector.load %arg1[%c0_1, %c0_2] : memref<128x128xf32, #tpu.memory_space<vmem>>, vector<128x128xf32>
    %cst = arith.constant dense<0.000000e+00> : vector<8x128xf32>
    %2 = tpu.matmul %0, %1, %cst {dimension_numbers = #tpu.dot_dimension_numbers<[1], [0], [0], [1], [0, 0, 1, 1], [], []>} : vector<8x128xf32>, vector<128x128xf32>, vector<8x128xf32> -> vector<8x128xf32>
    %c0_3 = arith.constant 0 : index
    %c0_4 = arith.constant 0 : index
    %3 = vector.load %arg2[%c0_3, %c0_4] : memref<1x128xf32, #tpu.memory_space<vmem>>, vector<1x128xf32>
    %4 = vector.broadcast %3 : vector<1x128xf32> to vector<8x128xf32>
    %5 = arith.addf %2, %4 : vector<8x128xf32>
    %cst_5 = arith.constant 0.000000e+00 : f32
    %6 = vector.broadcast %cst_5 : f32 to vector<8x128xf32>
    %7 = arith.maximumf %5, %6 : vector<8x128xf32>
    %cst_6 = arith.constant dense<0.000000e+00> : vector<128xf32>
    %8 = vector.multi_reduction <add>, %7, %cst_6 [0] : vector<8x128xf32> to vector<128xf32>
    %9 = vector.shape_cast %8 : vector<128xf32> to vector<1x128xf32>
    %cst_7 = arith.constant 8.000000e+00 : f32
    %10 = vector.broadcast %cst_7 : f32 to vector<1x128xf32>
    %11 = arith.divf %9, %10 : vector<1x128xf32>
    %12 = arith.mulf %7, %7 : vector<8x128xf32>
    %cst_8 = arith.constant dense<0.000000e+00> : vector<128xf32>
    %13 = vector.multi_reduction <add>, %12, %cst_8 [0] : vector<8x128xf32> to vector<128xf32>
    %14 = vector.shape_cast %13 : vector<128xf32> to vector<1x128xf32>
    %cst_9 = arith.constant 8.000000e+00 : f32
    %15 = vector.broadcast %cst_9 : f32 to vector<1x128xf32>
    %16 = arith.divf %14, %15 : vector<1x128xf32>
    %17 = arith.mulf %11, %11 : vector<1x128xf32>
    %18 = arith.subf %16, %17 : vector<1x128xf32>
    %cst_10 = arith.constant 0.000000e+00 : f32
    %19 = vector.broadcast %cst_10 : f32 to vector<1x128xf32>
    %20 = arith.maximumf %18, %19 : vector<1x128xf32>
    %c0_11 = arith.constant 0 : index
    %c0_12 = arith.constant 0 : index
    %21 = vector.load %arg3[%c0_11, %c0_12] : memref<1x128xf32, #tpu.memory_space<vmem>>, vector<1x128xf32>
    %cst_13 = arith.constant 9.99999974E-6 : f32
    %22 = vector.broadcast %cst_13 : f32 to vector<1x128xf32>
    %23 = arith.addf %20, %22 : vector<1x128xf32>
    %24 = math.rsqrt %23 : vector<1x128xf32>
    %25 = arith.mulf %21, %24 : vector<1x128xf32>
    %c0_14 = arith.constant 0 : index
    %c0_15 = arith.constant 0 : index
    %26 = vector.load %arg4[%c0_14, %c0_15] : memref<1x128xf32, #tpu.memory_space<vmem>>, vector<1x128xf32>
    %27 = arith.mulf %11, %25 : vector<1x128xf32>
    %28 = arith.subf %26, %27 : vector<1x128xf32>
    %29 = vector.broadcast %25 : vector<1x128xf32> to vector<8x128xf32>
    %30 = arith.mulf %7, %29 : vector<8x128xf32>
    %31 = vector.broadcast %28 : vector<1x128xf32> to vector<8x128xf32>
    %32 = arith.addf %30, %31 : vector<8x128xf32>
    %c0_16 = arith.constant 0 : index
    %c0_17 = arith.constant 0 : index
    %33 = vector.load %arg5[%c0_16, %c0_17] : memref<128x128xf32, #tpu.memory_space<vmem>>, vector<128x128xf32>
    %cst_18 = arith.constant dense<0.000000e+00> : vector<8x128xf32>
    %34 = tpu.matmul %32, %33, %cst_18 {dimension_numbers = #tpu.dot_dimension_numbers<[1], [0], [0], [1], [0, 0, 1, 1], [], []>} : vector<8x128xf32>, vector<128x128xf32>, vector<8x128xf32> -> vector<8x128xf32>
    %c0_19 = arith.constant 0 : index
    %c0_20 = arith.constant 0 : index
    %35 = vector.load %arg6[%c0_19, %c0_20] : memref<1x128xf32, #tpu.memory_space<vmem>>, vector<1x128xf32>
    %36 = vector.broadcast %35 : vector<1x128xf32> to vector<8x128xf32>
    %37 = arith.addf %34, %36 : vector<8x128xf32>
    %cst_21 = arith.constant 0.000000e+00 : f32
    %38 = vector.broadcast %cst_21 : f32 to vector<8x128xf32>
    %39 = arith.maximumf %37, %38 : vector<8x128xf32>
    %cst_22 = arith.constant dense<0.000000e+00> : vector<128xf32>
    %40 = vector.multi_reduction <add>, %39, %cst_22 [0] : vector<8x128xf32> to vector<128xf32>
    %41 = vector.shape_cast %40 : vector<128xf32> to vector<1x128xf32>
    %cst_23 = arith.constant 8.000000e+00 : f32
    %42 = vector.broadcast %cst_23 : f32 to vector<1x128xf32>
    %43 = arith.divf %41, %42 : vector<1x128xf32>
    %44 = arith.mulf %39, %39 : vector<8x128xf32>
    %cst_24 = arith.constant dense<0.000000e+00> : vector<128xf32>
    %45 = vector.multi_reduction <add>, %44, %cst_24 [0] : vector<8x128xf32> to vector<128xf32>
    %46 = vector.shape_cast %45 : vector<128xf32> to vector<1x128xf32>
    %cst_25 = arith.constant 8.000000e+00 : f32
    %47 = vector.broadcast %cst_25 : f32 to vector<1x128xf32>
    %48 = arith.divf %46, %47 : vector<1x128xf32>
    %49 = arith.mulf %43, %43 : vector<1x128xf32>
    %50 = arith.subf %48, %49 : vector<1x128xf32>
    %cst_26 = arith.constant 0.000000e+00 : f32
    %51 = vector.broadcast %cst_26 : f32 to vector<1x128xf32>
    %52 = arith.maximumf %50, %51 : vector<1x128xf32>
    %c0_27 = arith.constant 0 : index
    %c0_28 = arith.constant 0 : index
    %53 = vector.load %arg7[%c0_27, %c0_28] : memref<1x128xf32, #tpu.memory_space<vmem>>, vector<1x128xf32>
    %cst_29 = arith.constant 9.99999974E-6 : f32
    %54 = vector.broadcast %cst_29 : f32 to vector<1x128xf32>
    %55 = arith.addf %52, %54 : vector<1x128xf32>
    %56 = math.rsqrt %55 : vector<1x128xf32>
    %57 = arith.mulf %53, %56 : vector<1x128xf32>
    %c0_30 = arith.constant 0 : index
    %c0_31 = arith.constant 0 : index
    %58 = vector.load %arg8[%c0_30, %c0_31] : memref<1x128xf32, #tpu.memory_space<vmem>>, vector<1x128xf32>
    %59 = arith.mulf %43, %57 : vector<1x128xf32>
    %60 = arith.subf %58, %59 : vector<1x128xf32>
    %61 = vector.broadcast %57 : vector<1x128xf32> to vector<8x128xf32>
    %62 = arith.mulf %39, %61 : vector<8x128xf32>
    %63 = vector.broadcast %60 : vector<1x128xf32> to vector<8x128xf32>
    %64 = arith.addf %62, %63 : vector<8x128xf32>
    %c0_32 = arith.constant 0 : index
    %c0_33 = arith.constant 0 : index
    %65 = vector.load %arg9[%c0_32, %c0_33] : memref<128x128xf32, #tpu.memory_space<vmem>>, vector<128x128xf32>
    %cst_34 = arith.constant dense<0.000000e+00> : vector<8x128xf32>
    %66 = tpu.matmul %64, %65, %cst_34 {dimension_numbers = #tpu.dot_dimension_numbers<[1], [0], [0], [1], [0, 0, 1, 1], [], []>} : vector<8x128xf32>, vector<128x128xf32>, vector<8x128xf32> -> vector<8x128xf32>
    %c0_35 = arith.constant 0 : index
    %c0_36 = arith.constant 0 : index
    %67 = vector.load %arg10[%c0_35, %c0_36] : memref<1x128xf32, #tpu.memory_space<vmem>>, vector<1x128xf32>
    %68 = vector.broadcast %67 : vector<1x128xf32> to vector<8x128xf32>
    %69 = arith.addf %66, %68 : vector<8x128xf32>
    %cst_37 = arith.constant 0.000000e+00 : f32
    %70 = vector.broadcast %cst_37 : f32 to vector<8x128xf32>
    %71 = arith.maximumf %69, %70 : vector<8x128xf32>
    %cst_38 = arith.constant dense<0.000000e+00> : vector<128xf32>
    %72 = vector.multi_reduction <add>, %71, %cst_38 [0] : vector<8x128xf32> to vector<128xf32>
    %73 = vector.shape_cast %72 : vector<128xf32> to vector<1x128xf32>
    %cst_39 = arith.constant 8.000000e+00 : f32
    %74 = vector.broadcast %cst_39 : f32 to vector<1x128xf32>
    %75 = arith.divf %73, %74 : vector<1x128xf32>
    %76 = arith.mulf %71, %71 : vector<8x128xf32>
    %cst_40 = arith.constant dense<0.000000e+00> : vector<128xf32>
    %77 = vector.multi_reduction <add>, %76, %cst_40 [0] : vector<8x128xf32> to vector<128xf32>
    %78 = vector.shape_cast %77 : vector<128xf32> to vector<1x128xf32>
    %cst_41 = arith.constant 8.000000e+00 : f32
    %79 = vector.broadcast %cst_41 : f32 to vector<1x128xf32>
    %80 = arith.divf %78, %79 : vector<1x128xf32>
    %81 = arith.mulf %75, %75 : vector<1x128xf32>
    %82 = arith.subf %80, %81 : vector<1x128xf32>
    %cst_42 = arith.constant 0.000000e+00 : f32
    %83 = vector.broadcast %cst_42 : f32 to vector<1x128xf32>
    %84 = arith.maximumf %82, %83 : vector<1x128xf32>
    %c0_43 = arith.constant 0 : index
    %c0_44 = arith.constant 0 : index
    %85 = vector.load %arg11[%c0_43, %c0_44] : memref<1x128xf32, #tpu.memory_space<vmem>>, vector<1x128xf32>
    %cst_45 = arith.constant 9.99999974E-6 : f32
    %86 = vector.broadcast %cst_45 : f32 to vector<1x128xf32>
    %87 = arith.addf %84, %86 : vector<1x128xf32>
    %88 = math.rsqrt %87 : vector<1x128xf32>
    %89 = arith.mulf %85, %88 : vector<1x128xf32>
    %c0_46 = arith.constant 0 : index
    %c0_47 = arith.constant 0 : index
    %90 = vector.load %arg12[%c0_46, %c0_47] : memref<1x128xf32, #tpu.memory_space<vmem>>, vector<1x128xf32>
    %91 = arith.mulf %75, %89 : vector<1x128xf32>
    %92 = arith.subf %90, %91 : vector<1x128xf32>
    %93 = vector.broadcast %89 : vector<1x128xf32> to vector<8x128xf32>
    %94 = arith.mulf %71, %93 : vector<8x128xf32>
    %95 = vector.broadcast %92 : vector<1x128xf32> to vector<8x128xf32>
    %96 = arith.addf %94, %95 : vector<8x128xf32>
    %c0_48 = arith.constant 0 : index
    %c0_49 = arith.constant 0 : index
    %97 = vector.load %arg13[%c0_48, %c0_49] : memref<128x128xf32, #tpu.memory_space<vmem>>, vector<128x128xf32>
    %cst_50 = arith.constant dense<0.000000e+00> : vector<8x128xf32>
    %98 = tpu.matmul %96, %97, %cst_50 {dimension_numbers = #tpu.dot_dimension_numbers<[1], [0], [0], [1], [0, 0, 1, 1], [], []>} : vector<8x128xf32>, vector<128x128xf32>, vector<8x128xf32> -> vector<8x128xf32>
    %c0_51 = arith.constant 0 : index
    %c0_52 = arith.constant 0 : index
    %99 = vector.load %arg14[%c0_51, %c0_52] : memref<1x128xf32, #tpu.memory_space<vmem>>, vector<1x128xf32>
    %100 = vector.broadcast %99 : vector<1x128xf32> to vector<8x128xf32>
    %101 = arith.addf %98, %100 : vector<8x128xf32>
    %c0_53 = arith.constant 0 : index
    %c0_54 = arith.constant 0 : index
    %102 = vector.load %arg15[%c0_53, %c0_54] : memref<8x128xf32, #tpu.memory_space<vmem>>, vector<8x128xf32>
    tpu.vector_store %arg15[%c0_53, %c0_54], %101 {strides = array<i32>} : memref<8x128xf32, #tpu.memory_space<vmem>>, vector<8x128xf32>,
    return
  }
}

</mosaic_0001>

<llo_original>
// kernel: mlp_decoder_forward.1
$region0: #{mlp_decoder_forward.1}
  #allocation0 [shape = 'u32[]', space=smem, size = 0x4, offset = 0x4, fixed_abs, tag = 'smem constant byte address 0x4 - core index']
  #allocation1 [shape = 'u32[144,128]{1,0:T(1,128)}', space=vmem, size = 0x12000, scoped, tag = 'internal scratch']
  %s0 = inlined_call_operand.vmem [shape: f32[8,128], index: 0, kind: input, shape index: {}]
  %s1 = inlined_call_operand.vmem [shape: f32[128,128], index: 1, kind: input, shape index: {}]
  %s2 = inlined_call_operand.vmem [shape: f32[1,128], index: 2, kind: input, shape index: {}]
  %s3 = inlined_call_operand.vmem [shape: f32[1,128], index: 3, kind: input, shape index: {}]
  %s4 = inlined_call_operand.vmem [shape: f32[1,128], index: 4, kind: input, shape index: {}]
  %s5 = inlined_call_operand.vmem [shape: f32[128,128], index: 5, kind: input, shape index: {}]
  %s6 = inlined_call_operand.vmem [shape: f32[1,128], index: 6, kind: input, shape index: {}]
  %s7 = inlined_call_operand.vmem [shape: f32[1,128], index: 7, kind: input, shape index: {}]
  %s8 = inlined_call_operand.vmem [shape: f32[1,128], index: 8, kind: input, shape index: {}]
  %s9 = inlined_call_operand.vmem [shape: f32[128,128], index: 9, kind: input, shape index: {}]
  %s10 = inlined_call_operand.vmem [shape: f32[1,128], index: 10, kind: input, shape index: {}]
  %s11 = inlined_call_operand.vmem [shape: f32[1,128], index: 11, kind: input, shape index: {}]
  %s12 = inlined_call_operand.vmem [shape: f32[1,128], index: 12, kind: input, shape index: {}]
  %s13 = inlined_call_operand.vmem [shape: f32[128,128], index: 13, kind: input, shape index: {}]
  %s14 = inlined_call_operand.vmem [shape: f32[1,128], index: 14, kind: input, shape index: {}]
  %s15 = inlined_call_operand.vmem [shape: f32[8,128], index: 15, kind: output, shape index: {}]
  %s16 = sld [smem:[#allocation0]]
  $region70: #{mlp_decoder_forward.1} parent=0
    _
  %s18 = ssub.s32 1, %s16
  %s19 = scalar_select 0, %s18, %s16
  // Predicated region
  $region2: #{mlp_decoder_forward.1} parent=0 // pred_check
    _
  $region3: #{mlp_decoder_forward.1} parent=0 // pred_check_branch
    %21 = sbr.rel (0) target = $region5
  $region4: #{mlp_decoder_forward.1} parent=0 // pred_region
    _
  $region5: #{mlp_decoder_forward.1} parent=0 // pred_fallthru
    _
  // Predicated region
  $region6: #{mlp_decoder_forward.1} parent=0 // pred_check
    _
  $region7: #{mlp_decoder_forward.1} parent=0 // pred_check_branch
    %23 = sbr.rel (0) target = $region9
  $region8: #{mlp_decoder_forward.1} parent=0 // pred_region
    _
  $region9: #{mlp_decoder_forward.1} parent=0 // pred_fallthru
    _
  // Predicated region
  $region10: #{mlp_decoder_forward.1} parent=0 // pred_check
    _
  $region11: #{mlp_decoder_forward.1} parent=0 // pred_check_branch
    %25 = sbr.rel (0) target = $region13
  $region12: #{mlp_decoder_forward.1} parent=0 // pred_region
    _
  $region13: #{mlp_decoder_forward.1} parent=0 // pred_fallthru
    _
  // Predicated region
  $region14: #{mlp_decoder_forward.1} parent=0 // pred_check
    _
  $region15: #{mlp_decoder_forward.1} parent=0 // pred_check_branch
    %27 = sbr.rel (0) target = $region17
  $region16: #{mlp_decoder_forward.1} parent=0 // pred_region
    _
  $region17: #{mlp_decoder_forward.1} parent=0 // pred_fallthru
    _
  // Predicated region
  $region18: #{mlp_decoder_forward.1} parent=0 // pred_check
    _
  $region19: #{mlp_decoder_forward.1} parent=0 // pred_check_branch
    %29 = sbr.rel (0) target = $region21
  $region20: #{mlp_decoder_forward.1} parent=0 // pred_region
    _
  $region21: #{mlp_decoder_forward.1} parent=0 // pred_fallthru
    _
  // Predicated region
  $region22: #{mlp_decoder_forward.1} parent=0 // pred_check
    _
  $region23: #{mlp_decoder_forward.1} parent=0 // pred_check_branch
    %31 = sbr.rel (0) target = $region25
  $region24: #{mlp_decoder_forward.1} parent=0 // pred_region
    _
  $region25: #{mlp_decoder_forward.1} parent=0 // pred_fallthru
    _
  // Predicated region
  $region26: #{mlp_decoder_forward.1} parent=0 // pred_check
    _
  $region27: #{mlp_decoder_forward.1} parent=0 // pred_check_branch
    %33 = sbr.rel (0) target = $region29
  $region28: #{mlp_decoder_forward.1} parent=0 // pred_region
    _
  $region29: #{mlp_decoder_forward.1} parent=0 // pred_fallthru
    _
  // Predicated region
  $region30: #{mlp_decoder_forward.1} parent=0 // pred_check
    _
  $region31: #{mlp_decoder_forward.1} parent=0 // pred_check_branch
    %35 = sbr.rel (0) target = $region33
  $region32: #{mlp_decoder_forward.1} parent=0 // pred_region
    _
  $region33: #{mlp_decoder_forward.1} parent=0 // pred_fallthru
    _
  // Predicated region
  $region34: #{mlp_decoder_forward.1} parent=0 // pred_check
    _
  $region35: #{mlp_decoder_forward.1} parent=0 // pred_check_branch
    %37 = sbr.rel (0) target = $region37
  $region36: #{mlp_decoder_forward.1} parent=0 // pred_region
    _
  $region37: #{mlp_decoder_forward.1} parent=0 // pred_fallthru
    _
  // Predicated region
  $region38: #{mlp_decoder_forward.1} parent=0 // pred_check
    _
  $region39: #{mlp_decoder_forward.1} parent=0 // pred_check_branch
    %39 = sbr.rel (0) target = $region41
  $region40: #{mlp_decoder_forward.1} parent=0 // pred_region
    _
  $region41: #{mlp_decoder_forward.1} parent=0 // pred_fallthru
    _
  // Predicated region
  $region42: #{mlp_decoder_forward.1} parent=0 // pred_check
    _
  $region43: #{mlp_decoder_forward.1} parent=0 // pred_check_branch
    %41 = sbr.rel (0) target = $region45
  $region44: #{mlp_decoder_forward.1} parent=0 // pred_region
    _
  $region45: #{mlp_decoder_forward.1} parent=0 // pred_fallthru
    _
  // Predicated region
  $region46: #{mlp_decoder_forward.1} parent=0 // pred_check
    _
  $region47: #{mlp_decoder_forward.1} parent=0 // pred_check_branch
    %43 = sbr.rel (0) target = $region49
  $region48: #{mlp_decoder_forward.1} parent=0 // pred_region
    _
  $region49: #{mlp_decoder_forward.1} parent=0 // pred_fallthru
    _
  // Predicated region
  $region50: #{mlp_decoder_forward.1} parent=0 // pred_check
    _
  $region51: #{mlp_decoder_forward.1} parent=0 // pred_check_branch
    %45 = sbr.rel (0) target = $region53
  $region52: #{mlp_decoder_forward.1} parent=0 // pred_region
    _
  $region53: #{mlp_decoder_forward.1} parent=0 // pred_fallthru
    _
  // Predicated region
  $region54: #{mlp_decoder_forward.1} parent=0 // pred_check
    _
  $region55: #{mlp_decoder_forward.1} parent=0 // pred_check_branch
    %47 = sbr.rel (0) target = $region57
  $region56: #{mlp_decoder_forward.1} parent=0 // pred_region
    _
  $region57: #{mlp_decoder_forward.1} parent=0 // pred_fallthru
    _
  // Predicated region
  $region58: #{mlp_decoder_forward.1} parent=0 // pred_check
    _
  $region59: #{mlp_decoder_forward.1} parent=0 // pred_check_branch
    %49 = sbr.rel (0) target = $region61
  $region60: #{mlp_decoder_forward.1} parent=0 // pred_region
    _
  $region61: #{mlp_decoder_forward.1} parent=0 // pred_fallthru
    _
  %v50 = vld [vmem:[%s0] sm:$0xff]
  %v51 = vld [vmem:[%s1] sm:$0xff]
  %v52 = vld [vmem:[%s1 + $0x8] sm:$0xff]
  %v53 = vld [vmem:[%s1 + $0x10] sm:$0xff]
  %v54 = vld [vmem:[%s1 + $0x18] sm:$0xff]
  %v55 = vld [vmem:[%s1 + $0x20] sm:$0xff]
  %v56 = vld [vmem:[%s1 + $0x28] sm:$0xff]
  %v57 = vld [vmem:[%s1 + $0x30] sm:$0xff]
  %v58 = vld [vmem:[%s1 + $0x38] sm:$0xff]
  %v59 = vld [vmem:[%s1 + $0x40] sm:$0xff]
  %v60 = vld [vmem:[%s1 + $0x48] sm:$0xff]
  %v61 = vld [vmem:[%s1 + $0x50] sm:$0xff]
  %v62 = vld [vmem:[%s1 + $0x58] sm:$0xff]
  %v63 = vld [vmem:[%s1 + $0x60] sm:$0xff]
  %v64 = vld [vmem:[%s1 + $0x68] sm:$0xff]
  %v65 = vld [vmem:[%s1 + $0x70] sm:$0xff]
  %v66 = vld [vmem:[%s1 + $0x78] sm:$0xff]
  %v67 = vld [vmem:[%s2] sm:$0x1]
  %v69 = vlaneseq
  %v70 = vshrl.u32 %v69, 7
  %v71 = vsub.s32 0, %v70
  %v72 = vrot.slane %v67, %v71
  %74 = vmatprep.subr.mxu0 0.0
  %75 = vmatpush1.msra.mxu0 %v51
  %76 = vmatprep.subr.mxu0 0.0
  %77 = vmatpush1.msra.mxu0 %v52
  %78 = vmatprep.subr.mxu0 0.0
  %79 = vmatpush1.msra.mxu0 %v53
  %80 = vmatprep.subr.mxu0 0.0
  %81 = vmatpush1.msra.mxu0 %v54
  %82 = vmatprep.subr.mxu0 0.0
  %83 = vmatpush1.msra.mxu0 %v55
  %84 = vmatprep.subr.mxu0 0.0
  %85 = vmatpush1.msra.mxu0 %v56
  %86 = vmatprep.subr.mxu0 0.0
  %87 = vmatpush1.msra.mxu0 %v57
  %88 = vmatprep.subr.mxu0 0.0
  %89 = vmatpush1.msra.mxu0 %v58
  %90 = vmatprep.subr.mxu0 0.0
  %91 = vmatpush1.msra.mxu0 %v59
  %92 = vmatprep.subr.mxu0 0.0
  %93 = vmatpush1.msra.mxu0 %v60
  %94 = vmatprep.subr.mxu0 0.0
  %95 = vmatpush1.msra.mxu0 %v61
  %96 = vmatprep.subr.mxu0 0.0
  %97 = vmatpush1.msra.mxu0 %v62
  %98 = vmatprep.subr.mxu0 0.0
  %99 = vmatpush1.msra.mxu0 %v63
  %100 = vmatprep.subr.mxu0 0.0
  %101 = vmatpush1.msra.mxu0 %v64
  %102 = vmatprep.subr.mxu0 0.0
  %103 = vmatpush1.msra.mxu0 %v65
  %104 = vmatprep.subr.mxu0 0.0
  %105 = vmatpush1.msra.mxu0 %v66
  %106 = vmatprep.subr.mxu0 0.0
  %107 = vmatpush1.msra.mxu0 0.0
  %108 = vmatprep.subr.mxu0 0.0
  %109 = vmatpush1.msra.mxu0 0.0
  %110 = vmatprep.subr.mxu0 0.0
  %111 = vmatpush1.msra.mxu0 0.0
  %112 = vmatprep.subr.mxu0 0.0
  %113 = vmatpush1.msra.mxu0 0.0
  %114 = vmatprep.subr.mxu0 0.0
  %115 = vmatpush1.msra.mxu0 0.0
  %116 = vmatprep.subr.mxu0 0.0
  %117 = vmatpush1.msra.mxu0 0.0
  %118 = vmatprep.subr.mxu0 0.0
  %119 = vmatpush1.msra.mxu0 0.0
  %120 = vmatprep.subr.mxu0 0.0
  %121 = vmatpush1.msra.mxu0 0.0
  %122 = vmatprep.subr.mxu0 0.0
  %123 = vmatpush1.msra.mxu0 0.0
  %124 = vmatprep.subr.mxu0 0.0
  %125 = vmatpush1.msra.mxu0 0.0
  %126 = vmatprep.subr.mxu0 0.0
  %127 = vmatpush1.msra.mxu0 0.0
  %128 = vmatprep.subr.mxu0 0.0
  %129 = vmatpush1.msra.mxu0 0.0
  %130 = vmatprep.subr.mxu0 0.0
  %131 = vmatpush1.msra.mxu0 0.0
  %132 = vmatprep.subr.mxu0 0.0
  %133 = vmatpush1.msra.mxu0 0.0
  %134 = vmatprep.subr.mxu0 0.0
  %135 = vmatpush1.msra.mxu0 0.0
  %136 = vmatprep.subr.mxu0 0.0
  %137 = vmatpush1.msra.mxu0 0.0
  %138 = vmatprep.mubr.f32.mxu0 0.0
  %139 = vmatmul.mubr.f32.gmra.mrb[0].mxu0 %v50
  %v140 = vpop.f32.mrb[0].mxu0
  %v141 = vadd.f32 %v72, %v140
  %v142 = vpop.f32.mrb[0].mxu0
  %143 = vdwg.mxu0
  %v144 = vmax.f32 %v141, 0.0
  %v145 = vrot.slane %v144, 4
  %v146 = vadd.f32 %v144, %v145
  %v147 = vrot.slane %v146, 2
  %v148 = vadd.f32 %v146, %v147
  %v149 = vrot.slane %v148, 1
  %v150 = vadd.f32 %v148, %v149
  %v151 = vrcp.pop 8.0
  %v152 = vmul.f32 %v150, %v151
  %v153 = vmul.f32 %v144, %v144
  %v154 = vrot.slane %v153, 4
  %v155 = vadd.f32 %v153, %v154
  %v156 = vrot.slane %v155, 2
  %v157 = vadd.f32 %v155, %v156
  %v158 = vrot.slane %v157, 1
  %v159 = vadd.f32 %v157, %v158
  %v160 = vmul.f32 %v159, %v151
  %v161 = vmul.f32 %v152, %v152
  %v162 = vsub.f32 %v160, %v161
  %v163 = vmax.f32 %v162, 0.0
  %v164 = vld [vmem:[%s3] sm:$0x1]
  %v165 = vadd.f32 %v163, 1e-05
  %v166 = vrsqrt.pop %v165
  %v167 = vmul.f32 %v164, %v166
  %v168 = vld [vmem:[%s4] sm:$0x1]
  %v169 = vmul.f32 %v152, %v167
  %v170 = vsub.f32 %v168, %v169
  %v172 = vlaneseq
  %v173 = vshrl.u32 %v172, 7
  %v174 = vsub.s32 0, %v173
  %v175 = vrot.slane %v167, %v174
  %v177 = vmul.f32 %v144, %v175
  %v179 = vlaneseq
  %v180 = vshrl.u32 %v179, 7
  %v181 = vsub.s32 0, %v180
  %v182 = vrot.slane %v170, %v181
  %v184 = vadd.f32 %v177, %v182
  %v185 = vld [vmem:[%s5] sm:$0xff]
  %v186 = vld [vmem:[%s5 + $0x8] sm:$0xff]
  %v187 = vld [vmem:[%s5 + $0x10] sm:$0xff]
  %v188 = vld [vmem:[%s5 + $0x18] sm:$0xff]
  %v189 = vld [vmem:[%s5 + $0x20] sm:$0xff]
  %v190 = vld [vmem:[%s5 + $0x28] sm:$0xff]
  %v191 = vld [vmem:[%s5 + $0x30] sm:$0xff]
  %v192 = vld [vmem:[%s5 + $0x38] sm:$0xff]
  %v193 = vld [vmem:[%s5 + $0x40] sm:$0xff]
  %v194 = vld [vmem:[%s5 + $0x48] sm:$0xff]
  %v195 = vld [vmem:[%s5 + $0x50] sm:$0xff]
  %v196 = vld [vmem:[%s5 + $0x58] sm:$0xff]
  %v197 = vld [vmem:[%s5 + $0x60] sm:$0xff]
  %v198 = vld [vmem:[%s5 + $0x68] sm:$0xff]
  %v199 = vld [vmem:[%s5 + $0x70] sm:$0xff]
  %v200 = vld [vmem:[%s5 + $0x78] sm:$0xff]
  %v201 = vld [vmem:[%s6] sm:$0x1]
  %v203 = vlaneseq
  %v204 = vshrl.u32 %v203, 7
  %v205 = vsub.s32 0, %v204
  %v206 = vrot.slane %v201, %v205
  %208 = vmatprep.subr.mxu0 0.0
  %209 = vmatpush1.msra.mxu0 %v185
  %210 = vmatprep.subr.mxu0 0.0
  %211 = vmatpush1.msra.mxu0 %v186
  %212 = vmatprep.subr.mxu0 0.0
  %213 = vmatpush1.msra.mxu0 %v187
  %214 = vmatprep.subr.mxu0 0.0
  %215 = vmatpush1.msra.mxu0 %v188
  %216 = vmatprep.subr.mxu0 0.0
  %217 = vmatpush1.msra.mxu0 %v189
  %218 = vmatprep.subr.mxu0 0.0
  %219 = vmatpush1.msra.mxu0 %v190
  %220 = vmatprep.subr.mxu0 0.0
  %221 = vmatpush1.msra.mxu0 %v191
  %222 = vmatprep.subr.mxu0 0.0
  %223 = vmatpush1.msra.mxu0 %v192
  %224 = vmatprep.subr.mxu0 0.0
  %225 = vmatpush1.msra.mxu0 %v193
  %226 = vmatprep.subr.mxu0 0.0
  %227 = vmatpush1.msra.mxu0 %v194
  %228 = vmatprep.subr.mxu0 0.0
  %229 = vmatpush1.msra.mxu0 %v195
  %230 = vmatprep.subr.mxu0 0.0
  %231 = vmatpush1.msra.mxu0 %v196
  %232 = vmatprep.subr.mxu0 0.0
  %233 = vmatpush1.msra.mxu0 %v197
  %234 = vmatprep.subr.mxu0 0.0
  %235 = vmatpush1.msra.mxu0 %v198
  %236 = vmatprep.subr.mxu0 0.0
  %237 = vmatpush1.msra.mxu0 %v199
  %238 = vmatprep.subr.mxu0 0.0
  %239 = vmatpush1.msra.mxu0 %v200
  %240 = vmatprep.subr.mxu0 0.0
  %241 = vmatpush1.msra.mxu0 0.0
  %242 = vmatprep.subr.mxu0 0.0
  %243 = vmatpush1.msra.mxu0 0.0
  %244 = vmatprep.subr.mxu0 0.0
  %245 = vmatpush1.msra.mxu0 0.0
  %246 = vmatprep.subr.mxu0 0.0
  %247 = vmatpush1.msra.mxu0 0.0
  %248 = vmatprep.subr.mxu0 0.0
  %249 = vmatpush1.msra.mxu0 0.0
  %250 = vmatprep.subr.mxu0 0.0
  %251 = vmatpush1.msra.mxu0 0.0
  %252 = vmatprep.subr.mxu0 0.0
  %253 = vmatpush1.msra.mxu0 0.0
  %254 = vmatprep.subr.mxu0 0.0
  %255 = vmatpush1.msra.mxu0 0.0
  %256 = vmatprep.subr.mxu0 0.0
  %257 = vmatpush1.msra.mxu0 0.0
  %258 = vmatprep.subr.mxu0 0.0
  %259 = vmatpush1.msra.mxu0 0.0
  %260 = vmatprep.subr.mxu0 0.0
  %261 = vmatpush1.msra.mxu0 0.0
  %262 = vmatprep.subr.mxu0 0.0
  %263 = vmatpush1.msra.mxu0 0.0
  %264 = vmatprep.subr.mxu0 0.0
  %265 = vmatpush1.msra.mxu0 0.0
  %266 = vmatprep.subr.mxu0 0.0
  %267 = vmatpush1.msra.mxu0 0.0
  %268 = vmatprep.subr.mxu0 0.0
  %269 = vmatpush1.msra.mxu0 0.0
  %270 = vmatprep.subr.mxu0 0.0
  %271 = vmatpush1.msra.mxu0 0.0
  %272 = vmatprep.mubr.f32.mxu0 0.0
  %273 = vmatmul.mubr.f32.gmra.mrb[0].mxu0 %v184
  %v274 = vpop.f32.mrb[0].mxu0
  %v275 = vadd.f32 %v206, %v274
  %v276 = vpop.f32.mrb[0].mxu0
  %277 = vdwg.mxu0
  %v278 = vmax.f32 %v275, 0.0
  %v279 = vrot.slane %v278, 4
  %v280 = vadd.f32 %v278, %v279
  %v281 = vrot.slane %v280, 2
  %v282 = vadd.f32 %v280, %v281
  %v283 = vrot.slane %v282, 1
  %v284 = vadd.f32 %v282, %v283
  %v285 = vmul.f32 %v284, %v151
  %v286 = vmul.f32 %v278, %v278
  %v287 = vrot.slane %v286, 4
  %v288 = vadd.f32 %v286, %v287
  %v289 = vrot.slane %v288, 2
  %v290 = vadd.f32 %v288, %v289
  %v291 = vrot.slane %v290, 1
  %v292 = vadd.f32 %v290, %v291
  %v293 = vmul.f32 %v292, %v151
  %v294 = vmul.f32 %v285, %v285
  %v295 = vsub.f32 %v293, %v294
  %v296 = vmax.f32 %v295, 0.0
  %v297 = vld [vmem:[%s7] sm:$0x1]
  %v298 = vadd.f32 %v296, 1e-05
  %v299 = vrsqrt.pop %v298
  %v300 = vmul.f32 %v297, %v299
  %v301 = vld [vmem:[%s8] sm:$0x1]
  %v302 = vmul.f32 %v285, %v300
  %v303 = vsub.f32 %v301, %v302
  %v305 = vlaneseq
  %v306 = vshrl.u32 %v305, 7
  %v307 = vsub.s32 0, %v306
  %v308 = vrot.slane %v300, %v307
  %v310 = vmul.f32 %v278, %v308
  %v312 = vlaneseq
  %v313 = vshrl.u32 %v312, 7
  %v314 = vsub.s32 0, %v313
  %v315 = vrot.slane %v303, %v314
  %v317 = vadd.f32 %v310, %v315
  %v318 = vld [vmem:[%s9] sm:$0xff]
  %v319 = vld [vmem:[%s9 + $0x8] sm:$0xff]
  %v320 = vld [vmem:[%s9 + $0x10] sm:$0xff]
  %v321 = vld [vmem:[%s9 + $0x18] sm:$0xff]
  %v322 = vld [vmem:[%s9 + $0x20] sm:$0xff]
  %v323 = vld [vmem:[%s9 + $0x28] sm:$0xff]
  %v324 = vld [vmem:[%s9 + $0x30] sm:$0xff]
  %v325 = vld [vmem:[%s9 + $0x38] sm:$0xff]
  %v326 = vld [vmem:[%s9 + $0x40] sm:$0xff]
  %v327 = vld [vmem:[%s9 + $0x48] sm:$0xff]
  %v328 = vld [vmem:[%s9 + $0x50] sm:$0xff]
  %v329 = vld [vmem:[%s9 + $0x58] sm:$0xff]
  %v330 = vld [vmem:[%s9 + $0x60] sm:$0xff]
  %v331 = vld [vmem:[%s9 + $0x68] sm:$0xff]
  %v332 = vld [vmem:[%s9 + $0x70] sm:$0xff]
  %v333 = vld [vmem:[%s9 + $0x78] sm:$0xff]
  %v334 = vld [vmem:[%s10] sm:$0x1]
  %v336 = vlaneseq
  %v337 = vshrl.u32 %v336, 7
  %v338 = vsub.s32 0, %v337
  %v339 = vrot.slane %v334, %v338
  %341 = vmatprep.subr.mxu0 0.0
  %342 = vmatpush1.msra.mxu0 %v318
  %343 = vmatprep.subr.mxu0 0.0
  %344 = vmatpush1.msra.mxu0 %v319
  %345 = vmatprep.subr.mxu0 0.0
  %346 = vmatpush1.msra.mxu0 %v320
  %347 = vmatprep.subr.mxu0 0.0
  %348 = vmatpush1.msra.mxu0 %v321
  %349 = vmatprep.subr.mxu0 0.0
  %350 = vmatpush1.msra.mxu0 %v322
  %351 = vmatprep.subr.mxu0 0.0
  %352 = vmatpush1.msra.mxu0 %v323
  %353 = vmatprep.subr.mxu0 0.0
  %354 = vmatpush1.msra.mxu0 %v324
  %355 = vmatprep.subr.mxu0 0.0
  %356 = vmatpush1.msra.mxu0 %v325
  %357 = vmatprep.subr.mxu0 0.0
  %358 = vmatpush1.msra.mxu0 %v326
  %359 = vmatprep.subr.mxu0 0.0
  %360 = vmatpush1.msra.mxu0 %v327
  %361 = vmatprep.subr.mxu0 0.0
  %362 = vmatpush1.msra.mxu0 %v328
  %363 = vmatprep.subr.mxu0 0.0
  %364 = vmatpush1.msra.mxu0 %v329
  %365 = vmatprep.subr.mxu0 0.0
  %366 = vmatpush1.msra.mxu0 %v330
  %367 = vmatprep.subr.mxu0 0.0
  %368 = vmatpush1.msra.mxu0 %v331
  %369 = vmatprep.subr.mxu0 0.0
  %370 = vmatpush1.msra.mxu0 %v332
  %371 = vmatprep.subr.mxu0 0.0
  %372 = vmatpush1.msra.mxu0 %v333
  %373 = vmatprep.subr.mxu0 0.0
  %374 = vmatpush1.msra.mxu0 0.0
  %375 = vmatprep.subr.mxu0 0.0
  %376 = vmatpush1.msra.mxu0 0.0
  %377 = vmatprep.subr.mxu0 0.0
  %378 = vmatpush1.msra.mxu0 0.0
  %379 = vmatprep.subr.mxu0 0.0
  %380 = vmatpush1.msra.mxu0 0.0
  %381 = vmatprep.subr.mxu0 0.0
  %382 = vmatpush1.msra.mxu0 0.0
  %383 = vmatprep.subr.mxu0 0.0
  %384 = vmatpush1.msra.mxu0 0.0
  %385 = vmatprep.subr.mxu0 0.0
  %386 = vmatpush1.msra.mxu0 0.0
  %387 = vmatprep.subr.mxu0 0.0
  %388 = vmatpush1.msra.mxu0 0.0
  %389 = vmatprep.subr.mxu0 0.0
  %390 = vmatpush1.msra.mxu0 0.0
  %391 = vmatprep.subr.mxu0 0.0
  %392 = vmatpush1.msra.mxu0 0.0
  %393 = vmatprep.subr.mxu0 0.0
  %394 = vmatpush1.msra.mxu0 0.0
  %395 = vmatprep.subr.mxu0 0.0
  %396 = vmatpush1.msra.mxu0 0.0
  %397 = vmatprep.subr.mxu0 0.0
  %398 = vmatpush1.msra.mxu0 0.0
  %399 = vmatprep.subr.mxu0 0.0
  %400 = vmatpush1.msra.mxu0 0.0
  %401 = vmatprep.subr.mxu0 0.0
  %402 = vmatpush1.msra.mxu0 0.0
  %403 = vmatprep.subr.mxu0 0.0
  %404 = vmatpush1.msra.mxu0 0.0
  %405 = vmatprep.mubr.f32.mxu0 0.0
  %406 = vmatmul.mubr.f32.gmra.mrb[0].mxu0 %v317
  %v407 = vpop.f32.mrb[0].mxu0
  %v408 = vadd.f32 %v339, %v407
  %v409 = vpop.f32.mrb[0].mxu0
  %410 = vdwg.mxu0
  %v411 = vmax.f32 %v408, 0.0
  %v412 = vrot.slane %v411, 4
  %v413 = vadd.f32 %v411, %v412
  %v414 = vrot.slane %v413, 2
  %v415 = vadd.f32 %v413, %v414
  %v416 = vrot.slane %v415, 1
  %v417 = vadd.f32 %v415, %v416
  %v418 = vmul.f32 %v417, %v151
  %v419 = vmul.f32 %v411, %v411
  %v420 = vrot.slane %v419, 4
  %v421 = vadd.f32 %v419, %v420
  %v422 = vrot.slane %v421, 2
  %v423 = vadd.f32 %v421, %v422
  %v424 = vrot.slane %v423, 1
  %v425 = vadd.f32 %v423, %v424
  %v426 = vmul.f32 %v425, %v151
  %v427 = vmul.f32 %v418, %v418
  %v428 = vsub.f32 %v426, %v427
  %v429 = vmax.f32 %v428, 0.0
  %v430 = vld [vmem:[%s11] sm:$0x1]
  %v431 = vadd.f32 %v429, 1e-05
  %v432 = vrsqrt.pop %v431
  %v433 = vmul.f32 %v430, %v432
  %v434 = vld [vmem:[%s12] sm:$0x1]
  %v435 = vmul.f32 %v418, %v433
  %v436 = vsub.f32 %v434, %v435
  %v438 = vlaneseq
  %v439 = vshrl.u32 %v438, 7
  %v440 = vsub.s32 0, %v439
  %v441 = vrot.slane %v433, %v440
  %v443 = vmul.f32 %v411, %v441
  %v445 = vlaneseq
  %v446 = vshrl.u32 %v445, 7
  %v447 = vsub.s32 0, %v446
  %v448 = vrot.slane %v436, %v447
  %v450 = vadd.f32 %v443, %v448
  %v451 = vld [vmem:[%s13] sm:$0xff]
  %v452 = vld [vmem:[%s13 + $0x8] sm:$0xff]
  %v453 = vld [vmem:[%s13 + $0x10] sm:$0xff]
  %v454 = vld [vmem:[%s13 + $0x18] sm:$0xff]
  %v455 = vld [vmem:[%s13 + $0x20] sm:$0xff]
  %v456 = vld [vmem:[%s13 + $0x28] sm:$0xff]
  %v457 = vld [vmem:[%s13 + $0x30] sm:$0xff]
  %v458 = vld [vmem:[%s13 + $0x38] sm:$0xff]
  %v459 = vld [vmem:[%s13 + $0x40] sm:$0xff]
  %v460 = vld [vmem:[%s13 + $0x48] sm:$0xff]
  %v461 = vld [vmem:[%s13 + $0x50] sm:$0xff]
  %v462 = vld [vmem:[%s13 + $0x58] sm:$0xff]
  %v463 = vld [vmem:[%s13 + $0x60] sm:$0xff]
  %v464 = vld [vmem:[%s13 + $0x68] sm:$0xff]
  %v465 = vld [vmem:[%s13 + $0x70] sm:$0xff]
  %v466 = vld [vmem:[%s13 + $0x78] sm:$0xff]
  %v467 = vld [vmem:[%s14] sm:$0x1]
  %v469 = vlaneseq
  %v470 = vshrl.u32 %v469, 7
  %v471 = vsub.s32 0, %v470
  %v472 = vrot.slane %v467, %v471
  %474 = vmatprep.subr.mxu0 0.0
  %475 = vmatpush1.msra.mxu0 %v451
  %476 = vmatprep.subr.mxu0 0.0
  %477 = vmatpush1.msra.mxu0 %v452
  %478 = vmatprep.subr.mxu0 0.0
  %479 = vmatpush1.msra.mxu0 %v453
  %480 = vmatprep.subr.mxu0 0.0
  %481 = vmatpush1.msra.mxu0 %v454
  %482 = vmatprep.subr.mxu0 0.0
  %483 = vmatpush1.msra.mxu0 %v455
  %484 = vmatprep.subr.mxu0 0.0
  %485 = vmatpush1.msra.mxu0 %v456
  %486 = vmatprep.subr.mxu0 0.0
  %487 = vmatpush1.msra.mxu0 %v457
  %488 = vmatprep.subr.mxu0 0.0
  %489 = vmatpush1.msra.mxu0 %v458
  %490 = vmatprep.subr.mxu0 0.0
  %491 = vmatpush1.msra.mxu0 %v459
  %492 = vmatprep.subr.mxu0 0.0
  %493 = vmatpush1.msra.mxu0 %v460
  %494 = vmatprep.subr.mxu0 0.0
  %495 = vmatpush1.msra.mxu0 %v461
  %496 = vmatprep.subr.mxu0 0.0
  %497 = vmatpush1.msra.mxu0 %v462
  %498 = vmatprep.subr.mxu0 0.0
  %499 = vmatpush1.msra.mxu0 %v463
  %500 = vmatprep.subr.mxu0 0.0
  %501 = vmatpush1.msra.mxu0 %v464
  %502 = vmatprep.subr.mxu0 0.0
  %503 = vmatpush1.msra.mxu0 %v465
  %504 = vmatprep.subr.mxu0 0.0
  %505 = vmatpush1.msra.mxu0 %v466
  %506 = vmatprep.subr.mxu0 0.0
  %507 = vmatpush1.msra.mxu0 0.0
  %508 = vmatprep.subr.mxu0 0.0
  %509 = vmatpush1.msra.mxu0 0.0
  %510 = vmatprep.subr.mxu0 0.0
  %511 = vmatpush1.msra.mxu0 0.0
  %512 = vmatprep.subr.mxu0 0.0
  %513 = vmatpush1.msra.mxu0 0.0
  %514 = vmatprep.subr.mxu0 0.0
  %515 = vmatpush1.msra.mxu0 0.0
  %516 = vmatprep.subr.mxu0 0.0
  %517 = vmatpush1.msra.mxu0 0.0
  %518 = vmatprep.subr.mxu0 0.0
  %519 = vmatpush1.msra.mxu0 0.0
  %520 = vmatprep.subr.mxu0 0.0
  %521 = vmatpush1.msra.mxu0 0.0
  %522 = vmatprep.subr.mxu0 0.0
  %523 = vmatpush1.msra.mxu0 0.0
  %524 = vmatprep.subr.mxu0 0.0
  %525 = vmatpush1.msra.mxu0 0.0
  %526 = vmatprep.subr.mxu0 0.0
  %527 = vmatpush1.msra.mxu0 0.0
  %528 = vmatprep.subr.mxu0 0.0
  %529 = vmatpush1.msra.mxu0 0.0
  %530 = vmatprep.subr.mxu0 0.0
  %531 = vmatpush1.msra.mxu0 0.0
  %532 = vmatprep.subr.mxu0 0.0
  %533 = vmatpush1.msra.mxu0 0.0
  %534 = vmatprep.subr.mxu0 0.0
  %535 = vmatpush1.msra.mxu0 0.0
  %536 = vmatprep.subr.mxu0 0.0
  %537 = vmatpush1.msra.mxu0 0.0
  %538 = vmatprep.mubr.f32.mxu0 0.0
  %539 = vmatmul.mubr.f32.gmra.mrb[0].mxu0 %v450
  %v540 = vpop.f32.mrb[0].mxu0
  %v541 = vadd.f32 %v472, %v540
  %v542 = vpop.f32.mrb[0].mxu0
  %543 = vdwg.mxu0
  %544 = vst [vmem:[%s15] sm:$0xff] %v541
  // Predicated region
  $region62: #{mlp_decoder_forward.1} parent=0 // pred_check
    _
  $region63: #{mlp_decoder_forward.1} parent=0 // pred_check_branch
    %546 = sbr.rel (0) target = $region65
  $region64: #{mlp_decoder_forward.1} parent=0 // pred_region
    _
  $region65: #{mlp_decoder_forward.1} parent=0 // pred_fallthru
    _
  // Predicated region
  $region66: #{mlp_decoder_forward.1} parent=0 // pred_check
    _
  $region67: #{mlp_decoder_forward.1} parent=0 // pred_check_branch
    %548 = sbr.rel (0) target = $region69
  $region68: #{mlp_decoder_forward.1} parent=0 // pred_region
    _
  $region69: #{mlp_decoder_forward.1} parent=0 // pred_fallthru
    _

</llo_original>
